<compile_context>
chip_gen: v7x
topology: tpu7x:2x2x1
jax: 0.10.0
libtpu: 0.0.40
codegen_flags: <defaults>
</compile_context>

<pallas_src>
import jax
import jax.numpy as jnp
from jax.experimental import pallas as pl
from jax.experimental.pallas import tpu as pltpu


def _attention_kernel(x_ref, w_ref, ctx_ref, attn_ref):
    # x_ref:    (TB, S, Dp)  input tile (Dp = D zero-padded to a lane multiple)
    # w_ref:    (1, 1, Dp)   nn.Linear(D, 1) weight row (zero-padded)
    # ctx_ref:  (TB, 1, Dp)  context-vector output tile
    # attn_ref: (TB, 1, S)   lane-dense attention-weights output tile
    #
    # NOTE on partial last blocks (B % TB != 0): pad rows may hold undefined
    # data; softmax of garbage stays confined to those rows (all reductions
    # are per-row) and is discarded on writeback, so results are unaffected.
    x = x_ref[...]                                            # (TB, S, Dp)
    w = w_ref[...]                                            # (1, 1, Dp)

    # scores = x @ w^T as VPU multiply + lane reduce (an N=1 MXU matmul would
    # be ~1/256 utilized and the kernel is HBM-bound).  The Linear bias is
    # dropped: softmax is shift-invariant, so it cannot change the outputs.
    scores = jnp.sum(x * w, axis=-1, keepdims=True)           # (TB, S, 1)

    # Numerically stable softmax over the sequence axis (axis=1, sublanes).
    m = jnp.max(scores, axis=1, keepdims=True)                # (TB, 1, 1)
    e = jnp.exp(scores - m)                                   # (TB, S, 1)
    denom = jnp.sum(e, axis=1, keepdims=True)                 # (TB, 1, 1)
    weights = e * pl.reciprocal(denom, approx=False)          # (TB, S, 1)

    # context = sum over seq of x * weights.  weights (TB,S,1) lane-broadcasts
    # onto D lanes directly -> no S<->lane relayout on the context path.
    ctx_ref[...] = jnp.sum(x * weights, axis=1, keepdims=True).astype(ctx_ref.dtype)

    # The single relayout: (TB, S, 1) -> lane-dense (TB, 1, S) for the store.
    tb, s = weights.shape[0], weights.shape[1]
    attn_ref[...] = weights.reshape(tb, 1, s).astype(attn_ref.dtype)


def _hw_config():
    """Generation-aware tile / VMEM-budget / pipelining targets.

    Uses the per-core VMEM capacity as the generation proxy; falls back to the
    conservative (v7x-safe) configuration if the query is unavailable.
    """
    vmem_bytes = 64 << 20  # conservative default: assume the smallest VMEM
    try:
        info = pltpu.get_tpu_info()
        vmem_bytes = int(getattr(info, "vmem_capacity_bytes", vmem_bytes))
    except Exception:
        pass
    if vmem_bytes <= (64 << 20):
        # v7x-class: 64 MiB VMEM per TC, 2 TCs share the "parallel" grid axis.
        return dict(target_tile_bytes=4 << 20,
                    vmem_limit_bytes=40 << 20,
                    min_steps=8)           # >=4 steps per TensorCore
    # v5e / v6e class: 128 MiB VMEM, single TensorCore.
    return dict(target_tile_bytes=8 << 20,
                vmem_limit_bytes=64 << 20,
                min_steps=4)


def _choose_batch_tile(B, S, Dp, *, target_tile_bytes, min_steps, itemsize=4):
    """Batch tile: ~target-sized x slab, but small enough for >=min_steps grid
    steps so the auto-pipeline overlaps DMA with compute on every core."""
    per_batch = max(1, S * Dp * itemsize)
    tb = max(1, target_tile_bytes // per_batch)
    if B > 1:
        tb = min(tb, max(1, pl.cdiv(B, min_steps)))
    return int(min(tb, B))


def attention_layer(x, weight, bias=None):
    """Pallas forward of AttentionLayer.

    x: (B, S, D) f32; weight: (1, D) (PyTorch nn.Linear layout); bias: (1,).
    The bias is accepted for API parity but unused: softmax shift-invariance
    makes it a mathematical no-op.
    Returns (context_vector (B, D), attention_weights (B, S, 1)).
    """
    del bias  # dead operand: softmax(scores + c) == softmax(scores)
    B, S, D = x.shape
    x = x.astype(jnp.float32)
    w = weight.reshape(1, 1, D).astype(jnp.float32)

    # Zero-pad the feature dim to a lane multiple so the x DMA / VMEM tile is
    # lane-dense.  Exact: padded features add 0 to scores; padded ctx lanes
    # are sliced off below.
    Dp = max(128, ((D + 127) // 128) * 128)
    if Dp != D:
        x = jnp.pad(x, ((0, 0), (0, 0), (0, Dp - D)))
        w = jnp.pad(w, ((0, 0), (0, 0), (0, Dp - D)))

    cfg = _hw_config()
    TB = _choose_batch_tile(B, S, Dp,
                            target_tile_bytes=cfg["target_tile_bytes"],
                            min_steps=cfg["min_steps"])
    grid = (pl.cdiv(B, TB),)

    grid_spec = pltpu.PrefetchScalarGridSpec(
        num_scalar_prefetch=0,
        grid=grid,
        in_specs=[
            pl.BlockSpec((TB, S, Dp), lambda b: (b, 0, 0)),   # x tile
            pl.BlockSpec((1, 1, Dp), lambda b: (0, 0, 0)),    # shared weight row
        ],
        out_specs=[
            pl.BlockSpec((TB, 1, Dp), lambda b: (b, 0, 0)),   # context
            pl.BlockSpec((TB, 1, S), lambda b: (b, 0, 0)),    # weights (lane-dense)
        ],
    )

    # Advisory cost so XLA overlaps neighbouring HLO with this HBM-bound call.
    cost = pl.CostEstimate(
        flops=4 * B * S * Dp + 6 * B * S,
        transcendentals=B * S,
        bytes_accessed=4 * (B * S * Dp + Dp + B * Dp + B * S),
    )

    ctx_p, attn_p = pl.pallas_call(
        _attention_kernel,
        out_shape=(
            jax.ShapeDtypeStruct((B, 1, Dp), jnp.float32),    # context (padded D)
            jax.ShapeDtypeStruct((B, 1, S), jnp.float32),     # attention weights
        ),
        grid_spec=grid_spec,
        compiler_params=pltpu.CompilerParams(
            dimension_semantics=("parallel",),
            vmem_limit_bytes=cfg["vmem_limit_bytes"],
        ),
        cost_estimate=cost,
    )(x, w)

    ctx = ctx_p[:, 0, :D]                 # (B, D), padded lanes dropped
    attn = attn_p.reshape(B, S, 1)        # same row-major order -> free reshape
    return ctx, attn


def _reference(x, weight, bias):
    # Pure-JAX reference mirroring the PyTorch forward (bias included, which
    # also verifies that dropping it in the kernel is exact).
    scores = jnp.einsum("bsd,od->bso", x, weight) + bias              # (B, S, 1)
    w = jax.nn.softmax(scores, axis=1)
    ctx = jnp.sum(x * w, axis=1)
    return ctx, w


if __name__ == "__main__":
    key = jax.random.PRNGKey(0)
    k_x, k_w, k_b = jax.random.split(key, 3)

    B, S, D = 2, 8, 32
    x = jax.random.normal(k_x, (B, S, D), dtype=jnp.float32)

    # Deterministic parameter init mimicking nn.Linear(D, 1):
    # uniform in [-1/sqrt(D), 1/sqrt(D)]
    bound = 1.0 / jnp.sqrt(jnp.float32(D))
    weight = jax.random.uniform(k_w, (1, D), jnp.float32, -bound, bound)
    bias = jax.random.uniform(k_b, (1,), jnp.float32, -bound, bound)

    ctx, attn = attention_layer(x, weight, bias)
    jax.block_until_ready((ctx, attn))

    ref_ctx, ref_attn = _reference(x, weight, bias)
    assert ctx.shape == (B, D) and attn.shape == (B, S, 1)
    assert jnp.allclose(ctx, ref_ctx, atol=1e-5, rtol=1e-5), "context mismatch"
    assert jnp.allclose(attn, ref_attn, atol=1e-5, rtol=1e-5), "weights mismatch"

    print("KERNEL_OK")
</pallas_src>

<mosaic_0001>
module attributes {stable_mosaic.version = 11 : i64} {
  func.func @_attention_kernel(%arg0: i32, %arg1: memref<1x8x128xf32, #tpu.memory_space<vmem>>, %arg2: memref<1x1x128xf32, #tpu.memory_space<vmem>>, %arg3: memref<1x1x128xf32, #tpu.memory_space<vmem>>, %arg4: memref<1x1x8xf32, #tpu.memory_space<vmem>>) attributes {dimension_semantics = [#tpu.dimension_semantics<parallel>], iteration_bounds = array<i64: 2>, scalar_prefetch = 0 : i64, scratch_operands = 0 : i64, tpu.core_type = #tpu.core_type<tc>, window_params = [{transform_indices = @transform_0, window_bounds = array<i64: 1, 8, 128>}, {pipeline_mode = #tpu.pipeline_mode<synchronous>, transform_indices = @transform_1, window_bounds = array<i64: 1, 1, 128>}, {transform_indices = @transform_2, window_bounds = array<i64: 1, 1, 128>}, {transform_indices = @transform_3, window_bounds = array<i64: 1, 1, 8>}]} {
    %c0 = arith.constant 0 : index
    %c0_0 = arith.constant 0 : index
    %c0_1 = arith.constant 0 : index
    %0 = vector.load %arg1[%c0, %c0_0, %c0_1] : memref<1x8x128xf32, #tpu.memory_space<vmem>>, vector<1x8x128xf32>
    %c0_2 = arith.constant 0 : index
    %c0_3 = arith.constant 0 : index
    %c0_4 = arith.constant 0 : index
    %1 = vector.load %arg2[%c0_2, %c0_3, %c0_4] : memref<1x1x128xf32, #tpu.memory_space<vmem>>, vector<1x1x128xf32>
    %2 = vector.broadcast %1 : vector<1x1x128xf32> to vector<1x8x128xf32>
    %3 = arith.mulf %0, %2 : vector<1x8x128xf32>
    %cst = arith.constant dense<0.000000e+00> : vector<1x8xf32>
    %4 = vector.multi_reduction <add>, %3, %cst [2] : vector<1x8x128xf32> to vector<1x8xf32>
    %5 = vector.shape_cast %4 : vector<1x8xf32> to vector<1x8x1xf32>
    %cst_5 = arith.constant dense<0xFF800000> : vector<1x1xf32>
    %6 = vector.multi_reduction <maximumf>, %5, %cst_5 [1] : vector<1x8x1xf32> to vector<1x1xf32>
    %7 = vector.shape_cast %6 : vector<1x1xf32> to vector<1x1x1xf32>
    %8 = vector.broadcast %7 : vector<1x1x1xf32> to vector<1x8x1xf32>
    %9 = arith.subf %5, %8 : vector<1x8x1xf32>
    %10 = math.exp %9 : vector<1x8x1xf32>
    %cst_6 = arith.constant dense<0.000000e+00> : vector<1x1xf32>
    %11 = vector.multi_reduction <add>, %10, %cst_6 [1] : vector<1x8x1xf32> to vector<1x1xf32>
    %12 = vector.shape_cast %11 : vector<1x1xf32> to vector<1x1x1xf32>
    %13 = tpu.reciprocal %12 : vector<1x1x1xf32> -> vector<1x1x1xf32>
    %14 = vector.broadcast %13 : vector<1x1x1xf32> to vector<1x8x1xf32>
    %15 = arith.mulf %10, %14 : vector<1x8x1xf32>
    %16 = vector.broadcast %15 : vector<1x8x1xf32> to vector<1x8x128xf32>
    %17 = arith.mulf %0, %16 : vector<1x8x128xf32>
    %cst_7 = arith.constant dense<0.000000e+00> : vector<1x128xf32>
    %18 = vector.multi_reduction <add>, %17, %cst_7 [1] : vector<1x8x128xf32> to vector<1x128xf32>
    %19 = vector.shape_cast %18 : vector<1x128xf32> to vector<1x1x128xf32>
    %c0_8 = arith.constant 0 : index
    %c0_9 = arith.constant 0 : index
    %c0_10 = arith.constant 0 : index
    %20 = vector.load %arg3[%c0_8, %c0_9, %c0_10] : memref<1x1x128xf32, #tpu.memory_space<vmem>>, vector<1x1x128xf32>
    tpu.vector_store %arg3[%c0_8, %c0_9, %c0_10], %19 {strides = array<i32>} : memref<1x1x128xf32, #tpu.memory_space<vmem>>, vector<1x1x128xf32>,
    %21 = vector.shape_cast %15 : vector<1x8x1xf32> to vector<1x1x8xf32>
    %c0_11 = arith.constant 0 : index
    %c0_12 = arith.constant 0 : index
    %c0_13 = arith.constant 0 : index
    %22 = vector.load %arg4[%c0_11, %c0_12, %c0_13] : memref<1x1x8xf32, #tpu.memory_space<vmem>>, vector<1x1x8xf32>
    tpu.vector_store %arg4[%c0_11, %c0_12, %c0_13], %21 {strides = array<i32>} : memref<1x1x8xf32, #tpu.memory_space<vmem>>, vector<1x1x8xf32>,
    return
  }
  func.func @transform_0(%arg0: i32) -> (i32, i32, i32) {
    %c0_i32 = arith.constant 0 : i32
    %c0_i32_0 = arith.constant 0 : i32
    %c0_i32_1 = arith.constant 0 : i32
    return %arg0, %c0_i32, %c0_i32_0 : i32, i32, i32
  }
  func.func @transform_1(%arg0: i32) -> (i32, i32, i32) {
    %c0_i32 = arith.constant 0 : i32
    %c0_i32_0 = arith.constant 0 : i32
    %c0_i32_1 = arith.constant 0 : i32
    %c0_i32_2 = arith.constant 0 : i32
    return %c0_i32, %c0_i32_0, %c0_i32_1 : i32, i32, i32
  }
  func.func @transform_2(%arg0: i32) -> (i32, i32, i32) {
    %c0_i32 = arith.constant 0 : i32
    %c0_i32_0 = arith.constant 0 : i32
    %c0_i32_1 = arith.constant 0 : i32
    return %arg0, %c0_i32, %c0_i32_0 : i32, i32, i32
  }
  func.func @transform_3(%arg0: i32) -> (i32, i32, i32) {
    %c0_i32 = arith.constant 0 : i32
    %c0_i32_0 = arith.constant 0 : i32
    %c0_i32_1 = arith.constant 0 : i32
    return %arg0, %c0_i32, %c0_i32_0 : i32, i32, i32
  }
}

</mosaic_0001>

<llo_original>
// kernel: tpu_custom_call.1
$region0: #{tpu_custom_call.1}
  #allocation0 [shape = 'u32[]', space=smem, size = 0x4, offset = 0x4, fixed_abs, tag = 'smem constant byte address 0x4 - core index']
  #allocation1 [shape = 'u32[144,128]{1,0:T(1,128)}', space=vmem, size = 0x12000, scoped, tag = 'internal scratch']
  %s0 = inlined_call_operand.hbm [shape: f32[2,8,128], index: 0, kind: input, shape index: {}]
  %s1 = inlined_call_operand.vmem [shape: f32[1,1,128], index: 1, kind: input, shape index: {}]
  %s2 = inlined_call_operand.hbm [shape: f32[2,1,128], index: 2, kind: output, shape index: {0}]
  %s3 = inlined_call_operand.hbm [shape: f32[2,1,8], index: 3, kind: output, shape index: {1}]
  %4 = xla_tuple %s2, %s3
  %s5 = sld [smem:[#allocation0]]
  $region53: #{tpu_custom_call.1} parent=0
    _
  %s7 = ssub.s32 1, %s5
  %s8 = scalar_select 0, %s7, %s5
  $region1: #{tpu_custom_call.1} parent=0
    #allocation2 [shape = 'u8[8192]{0}', space=vmem, size = 0x2000, scoped, tag = 'input window, operand 0']
    #allocation3 [shape = 's32[2]{0}', space=sflag, size = 0x8, scoped, tag = 'scoped memory for tpu_custom_call.1']
    #allocation4 [shape = 's32[2]{0}', space=sflag, size = 0x8, scoped, tag = 'scoped memory for tpu_custom_call.1']
    #allocation5 [shape = 'u8[1024]{0}', space=vmem, size = 0x400, scoped, tag = 'output window, operand 0']
    #allocation6 [shape = 'u8[1024]{0}', space=vmem, size = 0x400, scoped, tag = 'output window, operand 1']
    #allocation7 [shape = 's32[2]{0}', space=sflag, size = 0x8, scoped, tag = 'scoped memory for tpu_custom_call.1']
    %9 = vsyncpa [#allocation3], 0
    %s10 = scalar_lea.sflag [#allocation3], 1
    %11 = vsyncpa %s10, 0
    %12 = vsyncpa [#allocation4], 0
    %s13 = scalar_lea.sflag [#allocation4], 1
    %14 = vsyncpa %s13, 0
    %15 = vsyncpa [#allocation7], 0
    %s16 = scalar_lea.sflag [#allocation7], 1
    %17 = vsyncpa %s16, 0
    loop: start=0, step=1, limit=4
    $region2: #{tpu_custom_call.1} parent=1 // loop_pre_header
      _
    $region3: #{tpu_custom_call.1} parent=1 // loop_header
      %s19 = sphi 0, %s23
      %p20 = scmp.ge.s32.totalorder %s19, 4
      %s29 = sphi 0, %s31
      %s32 = sphi 0, %s29
      %s33 = sphi 0, %s32
      %s49 = sphi 0, %s33
      %s53 = sphi 0, %s53
      %s55 = sphi 0, %s53
      %s56 = sphi 0, %s55
      %s70 = sphi 0, %s56
      %s76 = sphi 0, %s78
      %s79 = sphi 0, %s76
      %s80 = sphi 0, %s79
      %s96 = sphi 0, %s80
      %s102 = sphi 0, %s104
      %s105 = sphi 0, %s102
      %s106 = sphi 0, %s105
      %s122 = sphi 0, %s106
    $region4: #{tpu_custom_call.1} parent=1 // loop_header_branch
      %22 = sbr.rel (%p20) target = $region8
    $region5: #{tpu_custom_call.1} parent=1 // loop_body
      %s24 = ssub.s32 %s19, 1
      %s25 = ssub.s32 %s19, 2
      %s26 = sadd.s32 %s19, 1
      %s27 = ssub.s32 %s19, %s26
      %p28 = scmp.eq.s32.totalorder %s27, 0
      %s30 = sadd.s32 %s29, 1
      %s31 = scalar_select %p28, %s29, %s30
      %p34 = pneg %p28
      %p35 = scmp.eq.s32.totalorder %s19, 1
      %p36 = por %p34, %p35
      %p37 = scmp.ne.s32.totalorder %s29, %s32
      %p38 = scmp.eq.s32.totalorder %s19, 0
      %p39 = por %p37, %p38
      %p40 = scmp.ne.s32.totalorder %s29, %s32
      %p41 = scmp.eq.s32.totalorder %s24, 1
      %p42 = por %p40, %p41
      %p43 = scmp.ne.s32.totalorder %s32, %s33
      %p44 = scmp.eq.s32.totalorder %s24, 0
      %p45 = por %p43, %p44
      %p46 = scmp.ne.s32.totalorder %s32, %s33
      %p47 = scmp.eq.s32.totalorder %s25, 1
      %p48 = por %p46, %p47
      %p50 = scmp.ne.s32.totalorder %s33, %s49
      %p51 = scmp.eq.s32.totalorder %s25, 0
      %p52 = por %p50, %p51
      %s54 = sadd.s32 %s53, 1
      %p57 = scmp.eq.s32.totalorder %s19, 1
      %p58 = scmp.ne.s32.totalorder %s53, %s55
      %p59 = scmp.eq.s32.totalorder %s19, 0
      %p60 = por %p58, %p59
      %p61 = scmp.ne.s32.totalorder %s53, %s55
      %p62 = scmp.eq.s32.totalorder %s24, 1
      %p63 = por %p61, %p62
      %p64 = scmp.ne.s32.totalorder %s55, %s56
      %p65 = scmp.eq.s32.totalorder %s24, 0
      %p66 = por %p64, %p65
      %p67 = scmp.ne.s32.totalorder %s55, %s56
      %p68 = scmp.eq.s32.totalorder %s25, 1
      %p69 = por %p67, %p68
      %p71 = scmp.ne.s32.totalorder %s56, %s70
      %p72 = scmp.eq.s32.totalorder %s25, 0
      %p73 = por %p71, %p72
      %s74 = ssub.s32 %s19, %s26
      %p75 = scmp.eq.s32.totalorder %s74, 0
      %s77 = sadd.s32 %s76, 1
      %s78 = scalar_select %p75, %s76, %s77
      %p81 = pneg %p75
      %p82 = scmp.eq.s32.totalorder %s19, 1
      %p83 = por %p81, %p82
      %p84 = scmp.ne.s32.totalorder %s76, %s79
      %p85 = scmp.eq.s32.totalorder %s19, 0
      %p86 = por %p84, %p85
      %p87 = scmp.ne.s32.totalorder %s76, %s79
      %p88 = scmp.eq.s32.totalorder %s24, 1
      %p89 = por %p87, %p88
      %p90 = scmp.ne.s32.totalorder %s79, %s80
      %p91 = scmp.eq.s32.totalorder %s24, 0
      %p92 = por %p90, %p91
      %p93 = scmp.ne.s32.totalorder %s79, %s80
      %p94 = scmp.eq.s32.totalorder %s25, 1
      %p95 = por %p93, %p94
      %p97 = scmp.ne.s32.totalorder %s80, %s96
      %p98 = scmp.eq.s32.totalorder %s25, 0
      %p99 = por %p97, %p98
      %s100 = ssub.s32 %s19, %s26
      %p101 = scmp.eq.s32.totalorder %s100, 0
      %s103 = sadd.s32 %s102, 1
      %s104 = scalar_select %p101, %s102, %s103
      %p107 = pneg %p101
      %p108 = scmp.eq.s32.totalorder %s19, 1
      %p109 = por %p107, %p108
      %p110 = scmp.ne.s32.totalorder %s102, %s105
      %p111 = scmp.eq.s32.totalorder %s19, 0
      %p112 = por %p110, %p111
      %p113 = scmp.ne.s32.totalorder %s102, %s105
      %p114 = scmp.eq.s32.totalorder %s24, 1
      %p115 = por %p113, %p114
      %p116 = scmp.ne.s32.totalorder %s105, %s106
      %p117 = scmp.eq.s32.totalorder %s24, 0
      %p118 = por %p116, %p117
      %p119 = scmp.ne.s32.totalorder %s105, %s106
      %p120 = scmp.eq.s32.totalorder %s25, 1
      %p121 = por %p119, %p120
      %p123 = scmp.ne.s32.totalorder %s106, %s122
      %p124 = scmp.eq.s32.totalorder %s25, 0
      %p125 = por %p123, %p124
      %p126 = scmp.le.s32.totalorder 1, %s19
      %p127 = scmp.lt.s32.totalorder %s19, 3
      %p128 = pnand %p126, %p127
      %p129 = pneg %p128
      // Predicated region
      $region9: #{tpu_custom_call.1} parent=5 // pred_check
        _
      $region10: #{tpu_custom_call.1} parent=5 // pred_check_branch
        %131 = sbr.rel (%p128) target = $region12
      $region11: #{tpu_custom_call.1} parent=5 // pred_region
        %s132 = ssub.s32 %s19, 1
        // Predicated region
        $region13: #{tpu_custom_call.1} parent=11 // pred_check
          %p133 = pneg %p66
        $region14: #{tpu_custom_call.1} parent=11 // pred_check_branch
          %135 = sbr.rel (%p133) target = $region16
        $region15: #{tpu_custom_call.1} parent=11 // pred_region
          _
        $region16: #{tpu_custom_call.1} parent=11 // pred_fallthru
          _
      $region12: #{tpu_custom_call.1} parent=5 // pred_fallthru
        _
      %p136 = scmp.lt.s32.totalorder %s19, 2
      // Predicated region
      $region17: #{tpu_custom_call.1} parent=5 // pred_check
        %p137 = pneg %p136
      $region18: #{tpu_custom_call.1} parent=5 // pred_check_branch
        %139 = sbr.rel (%p137) target = $region20
      $region19: #{tpu_custom_call.1} parent=5 // pred_region
        // Predicated region
        $region21: #{tpu_custom_call.1} parent=19 // pred_check
          %p140 = pneg %p39
        $region22: #{tpu_custom_call.1} parent=19 // pred_check_branch
          %142 = sbr.rel (%p140) target = $region24
        $region23: #{tpu_custom_call.1} parent=19 // pred_region
          %s143 = sand.u32 %s29, 1
          %s144 = scalar_lea.sflag [#allocation3], %s143
          %s145 = sand.u32 %s29, 1
          %s146 = smul.addr %s145, 8
          %s147 = scalar_lea.vmem [#allocation2], %s146
          %s149 = ssub.s32 128, 128
          %150 = vsyncadd %s144, %s149
          %s151 = smul.addr %s19, 128
          %s152 = scalar_lea.hbm %s0, %s151
          %s154 = sshll.u32 %s147, 4
          %s155 = int_to_ptr.vmem [resolvable:$true] %s154
          %157 = dma.hbm_to_vmem [thread:$0]  %s152, 128, %s155, %s144
        $region24: #{tpu_custom_call.1} parent=19 // pred_fallthru
          _
      $region20: #{tpu_custom_call.1} parent=5 // pred_fallthru
        _
      %p158 = scmp.le.s32.totalorder 1, %s19
      %p159 = scmp.lt.s32.totalorder %s19, 3
      %p160 = pnand %p158, %p159
      %p161 = pneg %p160
      // Predicated region
      $region25: #{tpu_custom_call.1} parent=5 // pred_check
        _
      $region26: #{tpu_custom_call.1} parent=5 // pred_check_branch
        %163 = sbr.rel (%p160) target = $region28
      $region27: #{tpu_custom_call.1} parent=5 // pred_region
        %s164 = ssub.s32 %s19, 1
        %s165 = sand.u32 %s32, 1
        %s166 = scalar_lea.sflag [#allocation3], %s165
        %s167 = sand.u32 %s32, 1
        %s168 = smul.addr %s167, 8
        %s169 = scalar_lea.vmem [#allocation2], %s168
        // Predicated region
        $region29: #{tpu_custom_call.1} parent=27 // pred_check
          %p170 = pneg %p45
        $region30: #{tpu_custom_call.1} parent=27 // pred_check_branch
          %172 = sbr.rel (%p170) target = $region32
        $region31: #{tpu_custom_call.1} parent=27 // pred_region
          %173 = dma.done %s166, 128
        $region32: #{tpu_custom_call.1} parent=27 // pred_fallthru
          _
        %s174 = sand.u32 %s32, 1
        %s175 = scalar_lea.sflag [#allocation3], %s174
        %s176 = sand.u32 %s32, 1
        %s177 = smul.addr %s176, 8
        %s178 = scalar_lea.vmem [#allocation2], %s177
        %p179 = pneg %p45
        %p180 = pneg %p42
        %p181 = pneg %p66
        %p182 = pneg %p63
        %p183 = pneg %p92
        %p184 = pneg %p89
        %s185 = sand.u32 %s79, 1
        %s186 = scalar_lea.sflag [#allocation4], %s185
        %s187 = sand.u32 %s79, 1
        %s188 = scalar_lea.vmem [#allocation5], %s187
        %p189 = pneg %p118
        %p190 = pneg %p115
        %s191 = sand.u32 %s105, 1
        %s192 = scalar_lea.sflag [#allocation7], %s191
        %s193 = sand.u32 %s105, 1
        %s194 = scalar_lea.vmem [#allocation6], %s193
        %v195 = vld [vmem:[%s169] sm:$0xff]
        %v196 = vld [vmem:[%s1] sm:$0x1]
        %v198 = vlaneseq
        %v199 = vshrl.u32 %v198, 7
        %v200 = vsub.s32 0, %v199
        %v201 = vrot.slane %v196, %v200
        %v203 = vmul.f32 %v195, %v201
        %204 = vadd.xlane.f32.xlu0 %v203
        %v205 = vpop.xlane.xlu0 %204
        %v206 = vrot.slane %v205, 4
        %v207 = vmax.f32 %v205, %v206
        %v208 = vrot.slane %v207, 2
        %v209 = vmax.f32 %v207, %v208
        %v210 = vrot.slane %v209, 1
        %v211 = vmax.f32 %v209, %v210
        %v212 = vsub.f32 %v205, %v211
        %v213 = vmul.f32 %v212, 1.442695
        %v214 = vpow.pop %v213
        %v215 = vrot.slane %v214, 4
        %v216 = vadd.f32 %v214, %v215
        %v217 = vrot.slane %v216, 2
        %v218 = vadd.f32 %v216, %v217
        %v219 = vrot.slane %v218, 1
        %v220 = vadd.f32 %v218, %v219
        %v221 = vrcp.pop %v220
        %v222 = vmul.f32 %v214, %v221
        %v223 = vmul.f32 %v195, %v222
        %v224 = vrot.slane %v223, 4
        %v225 = vadd.f32 %v223, %v224
        %v226 = vrot.slane %v225, 2
        %v227 = vadd.f32 %v225, %v226
        %v228 = vrot.slane %v227, 1
        %v229 = vadd.f32 %v227, %v228
        %230 = vst [vmem:[%s188] sm:$0x1] %v229
        %v232 = vlaneseq
        %v233 = vand.u32 %v232, 127
        %v234 = vlaneseq
        %v235 = vshrl.u32 %v234, 7
        %v236 = vsub.s32 %v233, %v235
        %v237 = vrot.slane %v222, %v236
        %vm239 = vcmask 57344
        %240 = vst.msk [vmem:[%s194] sm:$0x1] %vm239, %v237
        %s241 = sand.u32 %s79, 1
        %s242 = scalar_lea.sflag [#allocation4], %s241
        %s243 = sand.u32 %s79, 1
        %s244 = scalar_lea.vmem [#allocation5], %s243
        %s245 = sand.u32 %s105, 1
        %s246 = scalar_lea.sflag [#allocation7], %s245
        %s247 = sand.u32 %s105, 1
        %s248 = scalar_lea.vmem [#allocation6], %s247
        // Predicated region
        $region33: #{tpu_custom_call.1} parent=27 // pred_check
          %p249 = pneg %p89
        $region34: #{tpu_custom_call.1} parent=27 // pred_check_branch
          %251 = sbr.rel (%p249) target = $region36
        $region35: #{tpu_custom_call.1} parent=27 // pred_region
          %s253 = ssub.s32 16, 16
          %254 = vsyncadd %s242, %s253
          %s255 = smul.addr %s24, 16
          %s256 = scalar_lea.hbm %s2, %s255
          %s258 = sshll.u32 %s244, 4
          %s259 = int_to_ptr.vmem [resolvable:$true] %s258
          %261 = dma.vmem_to_hbm [thread:$0]  %s259, 16, %s256, %s242
        $region36: #{tpu_custom_call.1} parent=27 // pred_fallthru
          _
        // Predicated region
        $region37: #{tpu_custom_call.1} parent=27 // pred_check
          %p262 = pneg %p115
        $region38: #{tpu_custom_call.1} parent=27 // pred_check_branch
          %264 = sbr.rel (%p262) target = $region40
        $region39: #{tpu_custom_call.1} parent=27 // pred_region
          %s266 = ssub.s32 16, 16
          %267 = vsyncadd %s246, %s266
          %s268 = smul.addr %s24, 16
          %s269 = scalar_lea.hbm %s3, %s268
          %s271 = sshll.u32 %s248, 4
          %s272 = int_to_ptr.vmem [resolvable:$true] %s271
          %274 = dma.vmem_to_hbm [thread:$0]  %s272, 16, %s269, %s246
        $region40: #{tpu_custom_call.1} parent=27 // pred_fallthru
          _
      $region28: #{tpu_custom_call.1} parent=5 // pred_fallthru
        _
      %p275 = scmp.le.s32.totalorder 2, %s19
      // Predicated region
      $region41: #{tpu_custom_call.1} parent=5 // pred_check
        %p276 = pneg %p275
      $region42: #{tpu_custom_call.1} parent=5 // pred_check_branch
        %278 = sbr.rel (%p276) target = $region44
      $region43: #{tpu_custom_call.1} parent=5 // pred_region
        %s279 = ssub.s32 %s19, 2
        // Predicated region
        $region45: #{tpu_custom_call.1} parent=43 // pred_check
          %p280 = pneg %p95
        $region46: #{tpu_custom_call.1} parent=43 // pred_check_branch
          %282 = sbr.rel (%p280) target = $region48
        $region47: #{tpu_custom_call.1} parent=43 // pred_region
          %s283 = sand.u32 %s80, 1
          %s284 = scalar_lea.sflag [#allocation4], %s283
          %s285 = sand.u32 %s80, 1
          %s286 = scalar_lea.vmem [#allocation5], %s285
          %287 = dma.done %s284, 16
        $region48: #{tpu_custom_call.1} parent=43 // pred_fallthru
          _
        // Predicated region
        $region49: #{tpu_custom_call.1} parent=43 // pred_check
          %p288 = pneg %p121
        $region50: #{tpu_custom_call.1} parent=43 // pred_check_branch
          %290 = sbr.rel (%p288) target = $region52
        $region51: #{tpu_custom_call.1} parent=43 // pred_region
          %s291 = sand.u32 %s106, 1
          %s292 = scalar_lea.sflag [#allocation7], %s291
          %s293 = sand.u32 %s106, 1
          %s294 = scalar_lea.vmem [#allocation6], %s293
          %295 = dma.done %s292, 16
        $region52: #{tpu_custom_call.1} parent=43 // pred_fallthru
          _
      $region44: #{tpu_custom_call.1} parent=5 // pred_fallthru
        _
    $region6: #{tpu_custom_call.1} parent=1 // loop_footer
      %s23 = sadd.s32 1, %s19
    $region7: #{tpu_custom_call.1} parent=1 // loop_footer_branch
      %18 = sbr.rel target = $region3
    $region8: #{tpu_custom_call.1} parent=1 // loop_exit
      _
    %296 = vsyncpa [#allocation3], 1
    %s297 = scalar_lea.sflag [#allocation3], 1
    %298 = vsyncpa %s297, 1
    %299 = vsyncpa [#allocation4], 1
    %s300 = scalar_lea.sflag [#allocation4], 1
    %301 = vsyncpa %s300, 1
    %302 = vsyncpa [#allocation7], 1
    %s303 = scalar_lea.sflag [#allocation7], 1
    %304 = vsyncpa %s303, 1

</llo_original>
